<compile_context>
chip_gen: v7x
topology: tpu7x:2x2x1
jax: 0.10.0
libtpu: 0.0.40
codegen_flags: <defaults>
</compile_context>

<pallas_src>
import functools

import jax
import jax.numpy as jnp
from jax import lax
from jax.experimental import pallas as pl
from jax.experimental.pallas import tpu as pltpu

LANE = 128
CHUNK_ROWS = 1024                      # compute-chunk height: bounds f32 temporaries
TARGET_BLOCK_BYTES = 8 * 1024 * 1024   # x+y native bytes streamed per grid step
VMEM_LIMIT_BYTES = 40 * 1024 * 1024    # > v5e 16MiB default scope, < v7x 64MiB physical


def _num_parallel_cores():
    """TensorCores a single Pallas kernel can shard a 'parallel' grid axis across."""
    try:
        kind = jax.devices()[0].device_kind.lower()
    except Exception:
        return 1
    # v4 / v7x expose 2 TensorCores per chip to one kernel; v5e/v6e have 1.
    return 2 if any(tag in kind for tag in ("v4", "v7", "7x")) else 1


def _make_reduce_kernel(criterion, block_rows, tiles_per_core, tiles_total,
                        rows, needs_mask):
    """Accumulate sum((x-y)^2) (l2) or sum(|x-y|) (l1) -> one f32 partial per core."""
    n_full = block_rows // CHUNK_ROWS
    rem = block_rows - n_full * CHUNK_ROWS

    def kernel(x_ref, y_ref, o_ref, acc_ref):
        c = pl.program_id(0)   # core / partial-sum index ("parallel")
        i = pl.program_id(1)   # tile index within this core ("arbitrary")

        @pl.when(i == 0)
        def _():
            acc_ref[...] = jnp.zeros_like(acc_ref)

        def accum_chunk(start, nrows, masked, tile_row0):
            # In-register upcast: HBM traffic stays at the native storage dtype.
            xd = x_ref[pl.ds(start, nrows), :].astype(jnp.float32)
            yd = y_ref[pl.ds(start, nrows), :].astype(jnp.float32)
            d = xd - yd
            val = d * d if criterion == "l2" else jnp.abs(d)
            if masked:
                rid = (tile_row0 + start
                       + lax.broadcasted_iota(jnp.int32, (nrows, LANE), 0))
                val = jnp.where(rid < rows, val, 0.0)
            # Sublane reduce into a single-vreg accumulator: no block-sized
            # accumulator read-modify-write, VMEM independent of block_rows.
            acc_ref[...] += jnp.sum(val, axis=0, keepdims=True)

        def accum_tile(masked):
            tile_row0 = (c * tiles_per_core + i) * block_rows
            if n_full > 0:
                @pl.loop(0, n_full)
                def _(j):
                    start = pl.multiple_of(j * CHUNK_ROWS, CHUNK_ROWS)
                    accum_chunk(start, CHUNK_ROWS, masked, tile_row0)
            if rem > 0:
                accum_chunk(n_full * CHUNK_ROWS, rem, masked, tile_row0)

        if needs_mask:
            # Only the final logical tile pays for the mask; all steady-state
            # tiles run the unmasked 3-op body (keeps the kernel HBM-bound).
            is_tail = (c * tiles_per_core + i) == (tiles_total - 1)

            @pl.when(jnp.logical_not(is_tail))
            def _():
                accum_tile(masked=False)

            @pl.when(is_tail)
            def _():
                accum_tile(masked=True)
        else:
            accum_tile(masked=False)

        @pl.when(i == tiles_per_core - 1)
        def _():
            # Single cross-lane reduce per core, once at the very end.
            o_ref[0, 0] = jnp.sum(acc_ref[...])

    return kernel


def _sum_diff_rows(x2, y2, criterion):
    """Sum of (x-y)^2 or |x-y| over a lane-dense (rows, 128) slab, as f32."""
    rows = x2.shape[0]
    itembytes = x2.dtype.itemsize + y2.dtype.itemsize
    max_rows = TARGET_BLOCK_BYTES // (LANE * itembytes)
    max_rows = max(CHUNK_ROWS, (max_rows // CHUNK_ROWS) * CHUNK_ROWS)
    block_rows = rows if rows <= max_rows else max_rows

    tiles_total = -(-rows // block_rows)
    n_tc = _num_parallel_cores()
    # Avoid clamped duplicate grid steps entirely: split across cores only when
    # the tile count divides evenly; otherwise produce a single partial.
    if n_tc > 1 and tiles_total >= n_tc and tiles_total % n_tc == 0:
        ncores = n_tc
    else:
        ncores = 1
    tiles_per_core = tiles_total // ncores
    assert ncores * tiles_per_core == tiles_total
    needs_mask = (tiles_total * block_rows) != rows

    kernel = _make_reduce_kernel(criterion, block_rows, tiles_per_core,
                                 tiles_total, rows, needs_mask)

    def in_map(c, i):
        return (c * tiles_per_core + i, 0)

    partials = pl.pallas_call(
        kernel,
        out_shape=jax.ShapeDtypeStruct((ncores, 1), jnp.float32),
        grid=(ncores, tiles_per_core),
        in_specs=[
            pl.BlockSpec((block_rows, LANE), in_map),
            pl.BlockSpec((block_rows, LANE), in_map),
        ],
        out_specs=pl.BlockSpec((1, 1), lambda c, i: (c, 0),
                               memory_space=pltpu.SMEM),
        scratch_shapes=[pltpu.VMEM((1, LANE), jnp.float32)],
        compiler_params=pltpu.CompilerParams(
            dimension_semantics=("parallel", "arbitrary"),
            vmem_limit_bytes=VMEM_LIMIT_BYTES),
    )(x2, y2)

    return jnp.sum(partials)


def _sum_diff_pallas(x, y, criterion):
    """sum over all elements of (x-y)^2 (l2) or |x-y| (l1), as f32."""
    assert x.shape == y.shape, "feature / target shape mismatch"
    n = x.size
    xf = x.reshape(-1)
    yf = y.reshape(-1)
    n_main = (n // LANE) * LANE

    total = jnp.float32(0.0)
    if n_main > 0:
        xm = xf if n_main == n else xf[:n_main]
        ym = yf if n_main == n else yf[:n_main]
        total = total + _sum_diff_rows(xm.reshape(n_main // LANE, LANE),
                                       ym.reshape(n_main // LANE, LANE),
                                       criterion)
    if n_main < n:
        # Sub-lane tail (<128 elements): plain jnp instead of padded HBM copies.
        dt = (xf[n_main:].astype(jnp.float32) - yf[n_main:].astype(jnp.float32))
        total = total + (jnp.sum(dt * dt) if criterion == "l2"
                         else jnp.sum(jnp.abs(dt)))
    return total


def _mean_diff_pallas(x, y, criterion):
    return _sum_diff_pallas(x, y, criterion) / jnp.float32(x.size)


@functools.partial(jax.jit, static_argnames=("criterion",))
def _fea_loss_jit(fea, fea_gt, fea_inter, fea_inter_gt, lmbda, criterion):
    loss = _mean_diff_pallas(fea, fea_gt, criterion)
    if fea_inter is not None and fea_inter_gt is not None:
        loss = loss + _mean_diff_pallas(fea_inter, fea_inter_gt, criterion)
    return {"fea_loss": loss,
            "weighted_fea_loss": loss * jnp.asarray(lmbda, jnp.float32)}


def fea_loss(fea, fea_gt, fea_inter=None, fea_inter_gt=None,
             lmbda=1.0, criterion="l2"):
    """JAX/Pallas equivalent of FeaLoss.forward (forward pass only)."""
    if criterion not in ("l2", "l1"):
        raise NotImplementedError(
            f"FeaLoss criterion [{criterion}] is not recognized.")
    return _fea_loss_jit(fea, fea_gt, fea_inter, fea_inter_gt,
                         jnp.float32(lmbda), criterion)


if __name__ == "__main__":
    key = jax.random.PRNGKey(0)
    k1, k2, k3, k4, k5, k6 = jax.random.split(key, 6)

    # Small NCHW feature maps, as implied by the PyTorch module's usage.
    fea = jax.random.normal(k1, (2, 4, 16, 16), dtype=jnp.float32)
    fea_gt = jax.random.normal(k2, (2, 4, 16, 16), dtype=jnp.float32)
    fea_inter = jax.random.normal(k3, (2, 4, 8, 8), dtype=jnp.float32)
    fea_inter_gt = jax.random.normal(k4, (2, 4, 8, 8), dtype=jnp.float32)

    out = fea_loss(fea, fea_gt, fea_inter, fea_inter_gt,
                   lmbda=0.5, criterion="l2")
    jax.block_until_ready(out)
    ref = jnp.mean((fea - fea_gt) ** 2) + jnp.mean((fea_inter - fea_inter_gt) ** 2)
    assert jnp.allclose(out["fea_loss"], ref, rtol=1e-5, atol=1e-6), (
        out["fea_loss"], ref)
    assert jnp.allclose(out["weighted_fea_loss"], ref * 0.5, rtol=1e-5, atol=1e-6)

    # l1 branch.
    out_l1 = fea_loss(fea, fea_gt, lmbda=2.0, criterion="l1")
    jax.block_until_ready(out_l1)
    ref_l1 = jnp.mean(jnp.abs(fea - fea_gt))
    assert jnp.allclose(out_l1["fea_loss"], ref_l1, rtol=1e-5, atol=1e-6)

    # Multi-tile + gated tail-mask path with bf16 storage (rows > one block).
    xa = jax.random.normal(k5, (2, 8, 384, 384), dtype=jnp.bfloat16)
    xb = jax.random.normal(k6, (2, 8, 384, 384), dtype=jnp.bfloat16)
    out_big = fea_loss(xa, xb, lmbda=1.0, criterion="l2")
    jax.block_until_ready(out_big)
    ref_big = jnp.mean((xa.astype(jnp.float32) - xb.astype(jnp.float32)) ** 2)
    assert jnp.allclose(out_big["fea_loss"], ref_big, rtol=1e-4, atol=1e-5)

    # Non-lane-multiple fallback (lane-aligned prefix kernel + scalar tail).
    ya = jax.random.normal(k5, (1, 3, 7, 13), dtype=jnp.float32)
    yb = jax.random.normal(k6, (1, 3, 7, 13), dtype=jnp.float32)
    out_odd = fea_loss(ya, yb, lmbda=1.0, criterion="l1")
    jax.block_until_ready(out_odd)
    ref_odd = jnp.mean(jnp.abs(ya - yb))
    assert jnp.allclose(out_odd["fea_loss"], ref_odd, rtol=1e-5, atol=1e-6)

    print("KERNEL_OK")
</pallas_src>

<mosaic_0001>
module attributes {stable_mosaic.version = 11 : i64} {
  func.func @kernel(%arg0: i32, %arg1: i32, %arg2: memref<16x128xf32, #tpu.memory_space<vmem>>, %arg3: memref<16x128xf32, #tpu.memory_space<vmem>>, %arg4: memref<1x1xf32, #tpu.memory_space<smem>>, %arg5: memref<1x128xf32, #tpu.memory_space<vmem>>) attributes {dimension_semantics = [#tpu.dimension_semantics<parallel>, #tpu.dimension_semantics<arbitrary>], iteration_bounds = array<i64: 1, 1>, scalar_prefetch = 0 : i64, scratch_operands = 1 : i64, tpu.core_type = #tpu.core_type<tc>, window_params = [{transform_indices = @transform_0, window_bounds = array<i64: 16, 128>}, {transform_indices = @transform_1, window_bounds = array<i64: 16, 128>}, {transform_indices = @transform_2, window_bounds = array<i64: 1, 1>}]} {
    %c0_i32 = arith.constant 0 : i32
    %0 = arith.cmpi eq, %arg1, %c0_i32 : i32
    %1 = arith.extui %0 : i1 to i32
    %c0_i32_0 = arith.constant 0 : i32
    %2 = arith.cmpi ne, %1, %c0_i32_0 : i32
    scf.if %2 {
      %cst_10 = arith.constant 0.000000e+00 : f32
      %15 = vector.broadcast %cst_10 : f32 to vector<1x128xf32>
      %c0_11 = arith.constant 0 : index
      %c0_12 = arith.constant 0 : index
      %16 = vector.load %arg5[%c0_11, %c0_12] : memref<1x128xf32, #tpu.memory_space<vmem>>, vector<1x128xf32>
      tpu.vector_store %arg5[%c0_11, %c0_12], %15 {strides = array<i32>} : memref<1x128xf32, #tpu.memory_space<vmem>>, vector<1x128xf32>,
    } else {
    }
    %c0 = arith.constant 0 : index
    %c0_1 = arith.constant 0 : index
    %3 = vector.load %arg2[%c0, %c0_1] : memref<16x128xf32, #tpu.memory_space<vmem>>, vector<16x128xf32>
    %c0_2 = arith.constant 0 : index
    %c0_3 = arith.constant 0 : index
    %4 = vector.load %arg3[%c0_2, %c0_3] : memref<16x128xf32, #tpu.memory_space<vmem>>, vector<16x128xf32>
    %5 = arith.subf %3, %4 : vector<16x128xf32>
    %6 = arith.mulf %5, %5 : vector<16x128xf32>
    %c0_4 = arith.constant 0 : index
    %c0_5 = arith.constant 0 : index
    %7 = vector.load %arg5[%c0_4, %c0_5] : memref<1x128xf32, #tpu.memory_space<vmem>>, vector<1x128xf32>
    %cst = arith.constant dense<0.000000e+00> : vector<128xf32>
    %8 = vector.multi_reduction <add>, %6, %cst [0] : vector<16x128xf32> to vector<128xf32>
    %9 = vector.shape_cast %8 : vector<128xf32> to vector<1x128xf32>
    %10 = arith.addf %7, %9 : vector<1x128xf32>
    %c0_6 = arith.constant 0 : index
    %c0_7 = arith.constant 0 : index
    %11 = vector.load %arg5[%c0_6, %c0_7] : memref<1x128xf32, #tpu.memory_space<vmem>>, vector<1x128xf32>
    tpu.vector_store %arg5[%c0_6, %c0_7], %10 {strides = array<i32>} : memref<1x128xf32, #tpu.memory_space<vmem>>, vector<1x128xf32>,
    %c0_i32_8 = arith.constant 0 : i32
    %12 = arith.cmpi eq, %arg1, %c0_i32_8 : i32
    %13 = arith.extui %12 : i1 to i32
    %c0_i32_9 = arith.constant 0 : i32
    %14 = arith.cmpi ne, %13, %c0_i32_9 : i32
    scf.if %14 {
      %c0_10 = arith.constant 0 : index
      %c0_11 = arith.constant 0 : index
      %15 = vector.load %arg5[%c0_10, %c0_11] : memref<1x128xf32, #tpu.memory_space<vmem>>, vector<1x128xf32>
      %16 = vector.shape_cast %15 : vector<1x128xf32> to vector<1x1x128xf32>
      %cst_12 = arith.constant dense<0.000000e+00> : vector<1xf32>
      %17 = vector.multi_reduction <add>, %16, %cst_12 [1, 2] : vector<1x1x128xf32> to vector<1xf32>
      %18 = vector.shape_cast %17 : vector<1xf32> to vector<1x1x1xf32>
      %19 = vector.extract %18[0, 0, 0] : f32 from vector<1x1x1xf32>
      %c0_13 = arith.constant 0 : index
      %c0_14 = arith.constant 0 : index
      %20 = memref.load %arg4[%c0_13, %c0_14] : memref<1x1xf32, #tpu.memory_space<smem>>
      memref.store %19, %arg4[%c0_13, %c0_14] : memref<1x1xf32, #tpu.memory_space<smem>>
    } else {
    }
    return
  }
  func.func @transform_0(%arg0: i32, %arg1: i32) -> (i32, i32) {
    %c1_i32 = arith.constant 1 : i32
    %0 = arith.muli %arg0, %c1_i32 : i32
    %1 = arith.addi %0, %arg1 : i32
    %c0_i32 = arith.constant 0 : i32
    %c0_i32_0 = arith.constant 0 : i32
    return %1, %c0_i32 : i32, i32
  }
  func.func @transform_1(%arg0: i32, %arg1: i32) -> (i32, i32) {
    %c1_i32 = arith.constant 1 : i32
    %0 = arith.muli %arg0, %c1_i32 : i32
    %1 = arith.addi %0, %arg1 : i32
    %c0_i32 = arith.constant 0 : i32
    %c0_i32_0 = arith.constant 0 : i32
    return %1, %c0_i32 : i32, i32
  }
  func.func @transform_2(%arg0: i32, %arg1: i32) -> (i32, i32) {
    %c0_i32 = arith.constant 0 : i32
    %c0_i32_0 = arith.constant 0 : i32
    return %arg0, %c0_i32 : i32, i32
  }
}

module attributes {stable_mosaic.version = 11 : i64} {
  func.func @kernel(%arg0: i32, %arg1: i32, %arg2: memref<4x128xf32, #tpu.memory_space<vmem>>, %arg3: memref<4x128xf32, #tpu.memory_space<vmem>>, %arg4: memref<1x1xf32, #tpu.memory_space<smem>>, %arg5: memref<1x128xf32, #tpu.memory_space<vmem>>) attributes {dimension_semantics = [#tpu.dimension_semantics<parallel>, #tpu.dimension_semantics<arbitrary>], iteration_bounds = array<i64: 1, 1>, scalar_prefetch = 0 : i64, scratch_operands = 1 : i64, tpu.core_type = #tpu.core_type<tc>, window_params = [{transform_indices = @transform_0, window_bounds = array<i64: 4, 128>}, {transform_indices = @transform_1, window_bounds = array<i64: 4, 128>}, {transform_indices = @transform_2, window_bounds = array<i64: 1, 1>}]} {
    %c0_i32 = arith.constant 0 : i32
    %0 = arith.cmpi eq, %arg1, %c0_i32 : i32
    %1 = arith.extui %0 : i1 to i32
    %c0_i32_0 = arith.constant 0 : i32
    %2 = arith.cmpi ne, %1, %c0_i32_0 : i32
    scf.if %2 {
      %cst_10 = arith.constant 0.000000e+00 : f32
      %15 = vector.broadcast %cst_10 : f32 to vector<1x128xf32>
      %c0_11 = arith.constant 0 : index
      %c0_12 = arith.constant 0 : index
      %16 = vector.load %arg5[%c0_11, %c0_12] : memref<1x128xf32, #tpu.memory_space<vmem>>, vector<1x128xf32>
      tpu.vector_store %arg5[%c0_11, %c0_12], %15 {strides = array<i32>} : memref<1x128xf32, #tpu.memory_space<vmem>>, vector<1x128xf32>,
    } else {
    }
    %c0 = arith.constant 0 : index
    %c0_1 = arith.constant 0 : index
    %3 = vector.load %arg2[%c0, %c0_1] : memref<4x128xf32, #tpu.memory_space<vmem>>, vector<4x128xf32>
    %c0_2 = arith.constant 0 : index
    %c0_3 = arith.constant 0 : index
    %4 = vector.load %arg3[%c0_2, %c0_3] : memref<4x128xf32, #tpu.memory_space<vmem>>, vector<4x128xf32>
    %5 = arith.subf %3, %4 : vector<4x128xf32>
    %6 = arith.mulf %5, %5 : vector<4x128xf32>
    %c0_4 = arith.constant 0 : index
    %c0_5 = arith.constant 0 : index
    %7 = vector.load %arg5[%c0_4, %c0_5] : memref<1x128xf32, #tpu.memory_space<vmem>>, vector<1x128xf32>
    %cst = arith.constant dense<0.000000e+00> : vector<128xf32>
    %8 = vector.multi_reduction <add>, %6, %cst [0] : vector<4x128xf32> to vector<128xf32>
    %9 = vector.shape_cast %8 : vector<128xf32> to vector<1x128xf32>
    %10 = arith.addf %7, %9 : vector<1x128xf32>
    %c0_6 = arith.constant 0 : index
    %c0_7 = arith.constant 0 : index
    %11 = vector.load %arg5[%c0_6, %c0_7] : memref<1x128xf32, #tpu.memory_space<vmem>>, vector<1x128xf32>
    tpu.vector_store %arg5[%c0_6, %c0_7], %10 {strides = array<i32>} : memref<1x128xf32, #tpu.memory_space<vmem>>, vector<1x128xf32>,
    %c0_i32_8 = arith.constant 0 : i32
    %12 = arith.cmpi eq, %arg1, %c0_i32_8 : i32
    %13 = arith.extui %12 : i1 to i32
    %c0_i32_9 = arith.constant 0 : i32
    %14 = arith.cmpi ne, %13, %c0_i32_9 : i32
    scf.if %14 {
      %c0_10 = arith.constant 0 : index
      %c0_11 = arith.constant 0 : index
      %15 = vector.load %arg5[%c0_10, %c0_11] : memref<1x128xf32, #tpu.memory_space<vmem>>, vector<1x128xf32>
      %16 = vector.shape_cast %15 : vector<1x128xf32> to vector<1x1x128xf32>
      %cst_12 = arith.constant dense<0.000000e+00> : vector<1xf32>
      %17 = vector.multi_reduction <add>, %16, %cst_12 [1, 2] : vector<1x1x128xf32> to vector<1xf32>
      %18 = vector.shape_cast %17 : vector<1xf32> to vector<1x1x1xf32>
      %19 = vector.extract %18[0, 0, 0] : f32 from vector<1x1x1xf32>
      %c0_13 = arith.constant 0 : index
      %c0_14 = arith.constant 0 : index
      %20 = memref.load %arg4[%c0_13, %c0_14] : memref<1x1xf32, #tpu.memory_space<smem>>
      memref.store %19, %arg4[%c0_13, %c0_14] : memref<1x1xf32, #tpu.memory_space<smem>>
    } else {
    }
    return
  }
  func.func @transform_0(%arg0: i32, %arg1: i32) -> (i32, i32) {
    %c1_i32 = arith.constant 1 : i32
    %0 = arith.muli %arg0, %c1_i32 : i32
    %1 = arith.addi %0, %arg1 : i32
    %c0_i32 = arith.constant 0 : i32
    %c0_i32_0 = arith.constant 0 : i32
    return %1, %c0_i32 : i32, i32
  }
  func.func @transform_1(%arg0: i32, %arg1: i32) -> (i32, i32) {
    %c1_i32 = arith.constant 1 : i32
    %0 = arith.muli %arg0, %c1_i32 : i32
    %1 = arith.addi %0, %arg1 : i32
    %c0_i32 = arith.constant 0 : i32
    %c0_i32_0 = arith.constant 0 : i32
    return %1, %c0_i32 : i32, i32
  }
  func.func @transform_2(%arg0: i32, %arg1: i32) -> (i32, i32) {
    %c0_i32 = arith.constant 0 : i32
    %c0_i32_0 = arith.constant 0 : i32
    return %arg0, %c0_i32 : i32, i32
  }
}

</mosaic_0001>

<llo_original>
// kernel: _fea_loss_jit.3
$region0: #{_fea_loss_jit.3}
  #allocation0 [shape = 'u32[]', space=smem, size = 0x4, offset = 0x4, fixed_abs, tag = 'smem constant byte address 0x4 - core index']
  #allocation1 [shape = 'u32[144,128]{1,0:T(1,128)}', space=vmem, size = 0x12000, scoped, tag = 'internal scratch']
  #allocation2 [shape = 'f32[1,128]{1,0:T(1,128)}', space=vmem, size = 0x200, scoped, tag = 'scratch operand']
  %s0 = inlined_call_operand.vmem [shape: f32[4,128], index: 0, kind: input, shape index: {}]
  %s1 = inlined_call_operand.vmem [shape: f32[4,128], index: 1, kind: input, shape index: {}]
  %s2 = inlined_call_operand.hbm [shape: f32[1,1], index: 2, kind: output, shape index: {}]
  %s3 = sld [smem:[#allocation0]]
  $region26: #{_fea_loss_jit.3} parent=0
    _
  %s5 = ssub.s32 1, %s3
  %s6 = scalar_select 0, %s5, %s3
  $region1: #{_fea_loss_jit.3} parent=0
    #allocation3 [shape = 'u8[512]{0}', space=smem, size = 0x200, scoped, tag = 'output window, operand 0, single buffered']
    #allocation4 [shape = 's32[1]{0}', space=sflag, size = 0x4, scoped, tag = 'scoped memory for _fea_loss_jit.3']
    %7 = vsyncpa [#allocation4], 0
    // Predicated region
    $region2: #{_fea_loss_jit.3} parent=1 // pred_check
      _
    $region3: #{_fea_loss_jit.3} parent=1 // pred_check_branch
      %9 = sbr.rel (0) target = $region5
    $region4: #{_fea_loss_jit.3} parent=1 // pred_region
      %s10 = sadd.s32 0, 0
      %p11 = scmp.lt.s32.totalorder %s10, 0
      %s12 = scalar_select %p11, %s10, 0
      %s13 = smul.addr %s12, 4
      %s14 = scalar_lea.vmem %s0, %s13
      %s15 = sadd.s32 0, 0
    $region5: #{_fea_loss_jit.3} parent=1 // pred_fallthru
      _
    // Predicated region
    $region6: #{_fea_loss_jit.3} parent=1 // pred_check
      _
    $region7: #{_fea_loss_jit.3} parent=1 // pred_check_branch
      %17 = sbr.rel (0) target = $region9
    $region8: #{_fea_loss_jit.3} parent=1 // pred_region
      %s18 = sadd.s32 0, 0
      %p19 = scmp.lt.s32.totalorder %s18, 0
      %s20 = scalar_select %p19, %s18, 0
      %s21 = smul.addr %s20, 4
      %s22 = scalar_lea.vmem %s1, %s21
      %s23 = sadd.s32 0, 0
    $region9: #{_fea_loss_jit.3} parent=1 // pred_fallthru
      _
    %s24 = sadd.s32 0, 0
    %p25 = scmp.lt.s32.totalorder %s24, 0
    %s26 = scalar_select %p25, %s24, 0
    %s27 = smul.addr %s26, 4
    %s28 = scalar_lea.vmem %s0, %s27
    %s29 = sadd.s32 0, 0
    %p30 = scmp.lt.s32.totalorder %s29, 0
    %s31 = scalar_select %p30, %s29, 0
    %s32 = smul.addr %s31, 4
    %s33 = scalar_lea.vmem %s1, %s32
    %s34 = sadd.s32 0, 0
    %p35 = scmp.lt.s32.totalorder %s34, 0
    %s36 = scalar_select %p35, %s34, 0
    %s37 = smul.addr %s36, 4
    %s38 = scalar_lea.vmem %s0, %s37
    %s39 = sadd.s32 0, 0
    %s40 = sadd.s32 0, 0
    %p41 = scmp.lt.s32.totalorder %s40, 0
    %s42 = scalar_select %p41, %s40, 0
    %s43 = smul.addr %s42, 4
    %s44 = scalar_lea.vmem %s1, %s43
    %s45 = sadd.s32 0, 0
    %p46 = scmp.eq.s32.totalorder 0, 0
    // Predicated region
    $region10: #{_fea_loss_jit.3} parent=1 // pred_check
      %p47 = pneg %p46
    $region11: #{_fea_loss_jit.3} parent=1 // pred_check_branch
      %49 = sbr.rel (%p47) target = $region13
    $region12: #{_fea_loss_jit.3} parent=1 // pred_region
      %50 = vst [vmem:[#allocation2] sm:$0x1] 0.0
    $region13: #{_fea_loss_jit.3} parent=1 // pred_fallthru
      _
    %v51 = vld [vmem:[%s38] sm:$0xf]
    %v52 = vld [vmem:[%s44] sm:$0xf]
    %v53 = vsub.f32 %v51, %v52
    %v54 = vmul.f32 %v53, %v53
    %v55 = vld [vmem:[#allocation2] sm:$0x1]
    %vm56 = vcmask 1043456
    %v57 = vsel %vm56, %v54, 0.0
    %v58 = vrot.slane %v57, 4
    %v59 = vadd.f32 %v57, %v58
    %v60 = vrot.slane %v59, 2
    %v61 = vadd.f32 %v59, %v60
    %v62 = vrot.slane %v61, 1
    %v63 = vadd.f32 %v61, %v62
    %v64 = vadd.f32 %v55, %v63
    %65 = vst [vmem:[#allocation2] sm:$0x1] %v64
    // Predicated region
    $region14: #{_fea_loss_jit.3} parent=1 // pred_check
      %p66 = pneg %p46
    $region15: #{_fea_loss_jit.3} parent=1 // pred_check_branch
      %68 = sbr.rel (%p66) target = $region17
    $region16: #{_fea_loss_jit.3} parent=1 // pred_region
      %v69 = vld [vmem:[#allocation2] sm:$0x1]
      %vm70 = vcmask 1040384
      %v71 = vsel %vm70, %v69, 0.0
      %72 = vadd.xlane.f32.xlu0 %v71
      %v73 = vpop.xlane.xlu0 %72
      %v74 = vrot.slane %v73, 4
      %v75 = vadd.f32 %v73, %v74
      %v76 = vrot.slane %v75, 2
      %v77 = vadd.f32 %v75, %v76
      %v78 = vrot.slane %v77, 1
      %v79 = vadd.f32 %v77, %v78
      %s80 = vtos %v79
      %s81 = scalar_lea.smem [#allocation3], 0
      %82 = sst [smem:[%s81]] %s80
    $region17: #{_fea_loss_jit.3} parent=1 // pred_fallthru
      _
    // Predicated region
    $region18: #{_fea_loss_jit.3} parent=1 // pred_check
      _
    $region19: #{_fea_loss_jit.3} parent=1 // pred_check_branch
      %84 = sbr.rel (0) target = $region21
    $region20: #{_fea_loss_jit.3} parent=1 // pred_region
      %s86 = ssub.s32 16, 16
      %87 = vsyncadd [#allocation4], %s86
      %90 = dma.smem_to_hbm [#allocation3], 16, %s2, [#allocation4]
    $region21: #{_fea_loss_jit.3} parent=1 // pred_fallthru
      _
    // Predicated region
    $region22: #{_fea_loss_jit.3} parent=1 // pred_check
      _
    $region23: #{_fea_loss_jit.3} parent=1 // pred_check_branch
      %92 = sbr.rel (0) target = $region25
    $region24: #{_fea_loss_jit.3} parent=1 // pred_region
      %93 = dma.done [#allocation4], 16
    $region25: #{_fea_loss_jit.3} parent=1 // pred_fallthru
      _
    %94 = sfence
    %95 = vsyncpa [#allocation4], 1

// kernel: _fea_loss_jit.2
$region0: #{_fea_loss_jit.2}
  #allocation0 [shape = 'u32[]', space=smem, size = 0x4, offset = 0x4, fixed_abs, tag = 'smem constant byte address 0x4 - core index']
  #allocation1 [shape = 'u32[144,128]{1,0:T(1,128)}', space=vmem, size = 0x12000, scoped, tag = 'internal scratch']
  #allocation2 [shape = 'f32[1,128]{1,0:T(1,128)}', space=vmem, size = 0x200, scoped, tag = 'scratch operand']
  %s0 = inlined_call_operand.vmem [shape: f32[16,128], index: 0, kind: input, shape index: {}]
  %s1 = inlined_call_operand.vmem [shape: f32[16,128], index: 1, kind: input, shape index: {}]
  %s2 = inlined_call_operand.hbm [shape: f32[1,1], index: 2, kind: output, shape index: {}]
  %s3 = sld [smem:[#allocation0]]
  $region26: #{_fea_loss_jit.2} parent=0
    _
  %s5 = ssub.s32 1, %s3
  %s6 = scalar_select 0, %s5, %s3
  $region1: #{_fea_loss_jit.2} parent=0
    #allocation3 [shape = 'u8[512]{0}', space=smem, size = 0x200, scoped, tag = 'output window, operand 0, single buffered']
    #allocation4 [shape = 's32[1]{0}', space=sflag, size = 0x4, scoped, tag = 'scoped memory for _fea_loss_jit.2']
    %7 = vsyncpa [#allocation4], 0
    // Predicated region
    $region2: #{_fea_loss_jit.2} parent=1 // pred_check
      _
    $region3: #{_fea_loss_jit.2} parent=1 // pred_check_branch
      %9 = sbr.rel (0) target = $region5
    $region4: #{_fea_loss_jit.2} parent=1 // pred_region
      %s10 = sadd.s32 0, 0
      %s11 = smul.u32 2, %s10
      %p12 = scmp.lt.s32.totalorder %s11, 1
      %s13 = scalar_select %p12, %s11, 1
      %s14 = smul.addr %s13, 8
      %s15 = scalar_lea.vmem %s0, %s14
      %s16 = sadd.s32 0, 0
      %s17 = smul.u32 2, %s16
    $region5: #{_fea_loss_jit.2} parent=1 // pred_fallthru
      _
    // Predicated region
    $region6: #{_fea_loss_jit.2} parent=1 // pred_check
      _
    $region7: #{_fea_loss_jit.2} parent=1 // pred_check_branch
      %19 = sbr.rel (0) target = $region9
    $region8: #{_fea_loss_jit.2} parent=1 // pred_region
      %s20 = sadd.s32 0, 0
      %s21 = smul.u32 2, %s20
      %p22 = scmp.lt.s32.totalorder %s21, 1
      %s23 = scalar_select %p22, %s21, 1
      %s24 = smul.addr %s23, 8
      %s25 = scalar_lea.vmem %s1, %s24
      %s26 = sadd.s32 0, 0
      %s27 = smul.u32 2, %s26
    $region9: #{_fea_loss_jit.2} parent=1 // pred_fallthru
      _
    %s28 = sadd.s32 0, 0
    %s29 = smul.u32 2, %s28
    %p30 = scmp.lt.s32.totalorder %s29, 1
    %s31 = scalar_select %p30, %s29, 1
    %s32 = smul.addr %s31, 8
    %s33 = scalar_lea.vmem %s0, %s32
    %s34 = sadd.s32 0, 0
    %s35 = smul.u32 2, %s34
    %p36 = scmp.lt.s32.totalorder %s35, 1
    %s37 = scalar_select %p36, %s35, 1
    %s38 = smul.addr %s37, 8
    %s39 = scalar_lea.vmem %s1, %s38
    %s40 = sadd.s32 0, 0
    %s41 = smul.u32 2, %s40
    %p42 = scmp.lt.s32.totalorder %s41, 1
    %s43 = scalar_select %p42, %s41, 1
    %s44 = smul.addr %s43, 8
    %s45 = scalar_lea.vmem %s0, %s44
    %s46 = sadd.s32 0, 0
    %s47 = smul.u32 2, %s46
    %s48 = sadd.s32 0, 0
    %s49 = smul.u32 2, %s48
    %p50 = scmp.lt.s32.totalorder %s49, 1
    %s51 = scalar_select %p50, %s49, 1
    %s52 = smul.addr %s51, 8
    %s53 = scalar_lea.vmem %s1, %s52
    %s54 = sadd.s32 0, 0
    %s55 = smul.u32 2, %s54
    %p56 = scmp.eq.s32.totalorder 0, 0
    // Predicated region
    $region10: #{_fea_loss_jit.2} parent=1 // pred_check
      %p57 = pneg %p56
    $region11: #{_fea_loss_jit.2} parent=1 // pred_check_branch
      %59 = sbr.rel (%p57) target = $region13
    $region12: #{_fea_loss_jit.2} parent=1 // pred_region
      %60 = vst [vmem:[#allocation2] sm:$0x1] 0.0
    $region13: #{_fea_loss_jit.2} parent=1 // pred_fallthru
      _
    %v61 = vld [vmem:[%s45] sm:$0xff]
    %v62 = vld [vmem:[%s45 + $0x8] sm:$0xff]
    %v63 = vld [vmem:[%s53] sm:$0xff]
    %v64 = vld [vmem:[%s53 + $0x8] sm:$0xff]
    %v65 = vsub.f32 %v61, %v63
    %v66 = vsub.f32 %v62, %v64
    %v67 = vmul.f32 %v65, %v65
    %v68 = vmul.f32 %v66, %v66
    %v69 = vld [vmem:[#allocation2] sm:$0x1]
    %v70 = vadd.f32 %v67, %v68
    %v71 = vrot.slane %v70, 4
    %v72 = vadd.f32 %v70, %v71
    %v73 = vrot.slane %v72, 2
    %v74 = vadd.f32 %v72, %v73
    %v75 = vrot.slane %v74, 1
    %v76 = vadd.f32 %v74, %v75
    %v77 = vadd.f32 %v69, %v76
    %78 = vst [vmem:[#allocation2] sm:$0x1] %v77
    // Predicated region
    $region14: #{_fea_loss_jit.2} parent=1 // pred_check
      %p79 = pneg %p56
    $region15: #{_fea_loss_jit.2} parent=1 // pred_check_branch
      %81 = sbr.rel (%p79) target = $region17
    $region16: #{_fea_loss_jit.2} parent=1 // pred_region
      %v82 = vld [vmem:[#allocation2] sm:$0x1]
      %vm83 = vcmask 1040384
      %v84 = vsel %vm83, %v82, 0.0
      %85 = vadd.xlane.f32.xlu0 %v84
      %v86 = vpop.xlane.xlu0 %85
      %v87 = vrot.slane %v86, 4
      %v88 = vadd.f32 %v86, %v87
      %v89 = vrot.slane %v88, 2
      %v90 = vadd.f32 %v88, %v89
      %v91 = vrot.slane %v90, 1
      %v92 = vadd.f32 %v90, %v91
      %s93 = vtos %v92
      %s94 = scalar_lea.smem [#allocation3], 0
      %95 = sst [smem:[%s94]] %s93
    $region17: #{_fea_loss_jit.2} parent=1 // pred_fallthru
      _
    // Predicated region
    $region18: #{_fea_loss_jit.2} parent=1 // pred_check
      _
    $region19: #{_fea_loss_jit.2} parent=1 // pred_check_branch
      %97 = sbr.rel (0) target = $region21
    $region20: #{_fea_loss_jit.2} parent=1 // pred_region
      %s99 = ssub.s32 16, 16
      %100 = vsyncadd [#allocation4], %s99
      %103 = dma.smem_to_hbm [#allocation3], 16, %s2, [#allocation4]
    $region21: #{_fea_loss_jit.2} parent=1 // pred_fallthru
      _
    // Predicated region
    $region22: #{_fea_loss_jit.2} parent=1 // pred_check
      _
    $region23: #{_fea_loss_jit.2} parent=1 // pred_check_branch
      %105 = sbr.rel (0) target = $region25
    $region24: #{_fea_loss_jit.2} parent=1 // pred_region
      %106 = dma.done [#allocation4], 16
    $region25: #{_fea_loss_jit.2} parent=1 // pred_fallthru
      _
    %107 = sfence
    %108 = vsyncpa [#allocation4], 1

</llo_original>
